<compile_context>
chip_gen: v7x
topology: tpu7x:2x2x1
jax: 0.10.0
libtpu: 0.0.40
codegen_flags: <defaults>
</compile_context>

<pallas_src>
import jax
import jax.numpy as jnp
from jax import lax
from jax.experimental import pallas as pl
from jax.experimental.pallas import tpu as pltpu

EPS = 1e-5
NEG_SLOPE = 0.2
KH = KW = 4
STRIDE = 2
PAD = 1


def _round_up(a, b):
    return (a + b - 1) // b * b


def _cdiv(a, b):
    return (a + b - 1) // b


def _vmem_limit_bytes():
    """Generation-aware scoped-VMEM request (128 MiB on v5e/v6e, 64 MiB on v7x)."""
    try:
        cap = int(pltpu.get_tpu_info().vmem_capacity_bytes)
    except Exception:
        cap = 64 * 1024 * 1024  # conservative fallback, safe on every generation
    return int(min(max(cap * 3 // 4, 32 * 1024 * 1024), 112 * 1024 * 1024))


def _choose_tm(m, k, coutp, tile_budget):
    """Pick the M-tile so the (larger) pass-2 double-buffered working set fits VMEM."""
    resident = k * coutp * 2 + 2 * coutp * 4               # bf16 weights + scale/shift
    per_row = 2 * (k * 2) + 2 * (coutp * 4)                # 2x-buffered bf16 patches + f32 out
    tm = (tile_budget - resident) // max(per_row, 1)
    tm = max(128, min(4096, (tm // 128) * 128))
    return min(tm, _round_up(m, 128))


# ---------------------------------------------------------------------------
# Pass 1: conv-as-matmul (bf16 MXU, f32 accumulate), streaming per-channel
#         sum / sum-of-squares only (no y written; bias cancels through BN).
# ---------------------------------------------------------------------------
def _stats_kernel(p_ref, w_ref, sum_ref, sumsq_ref):
    @pl.when(pl.program_id(1) == 0)
    def _():
        sum_ref[...] = jnp.zeros_like(sum_ref)
        sumsq_ref[...] = jnp.zeros_like(sumsq_ref)

    y = jnp.dot(p_ref[...], w_ref[...], preferred_element_type=jnp.float32)
    # Zero-padded rows contribute exactly 0 (no bias), so no masking is needed.
    sum_ref[...] += jnp.sum(y, axis=0, keepdims=True).reshape(1, 1, -1)
    sumsq_ref[...] += jnp.sum(y * y, axis=0, keepdims=True).reshape(1, 1, -1)


# ---------------------------------------------------------------------------
# Pass 2: recompute the matmul with BatchNorm scale/shift folded into one FMA,
#         then LeakyReLU(0.2).  Fully parallel over M tiles.
# ---------------------------------------------------------------------------
def _conv_bn_act_kernel(p_ref, w_ref, scale_ref, shift_ref, o_ref):
    y = jnp.dot(p_ref[...], w_ref[...], preferred_element_type=jnp.float32)
    z = y * scale_ref[...] + shift_ref[...]
    o_ref[...] = jnp.maximum(z, NEG_SLOPE * z)


def _im2col(x):
    """x: [N, Cin, H, W] -> [N*OH*OW, Cin*KH*KW] (K ordered cin, kh, kw)."""
    n, cin, h, w = x.shape
    oh = (h + 2 * PAD - KH) // STRIDE + 1
    ow = (w + 2 * PAD - KW) // STRIDE + 1
    xp = jnp.pad(x, ((0, 0), (0, 0), (PAD, PAD), (PAD, PAD)))
    cols = []
    for i in range(KH):
        for j in range(KW):
            cols.append(xp[:, :, i:i + STRIDE * oh:STRIDE, j:j + STRIDE * ow:STRIDE])
    patches = jnp.stack(cols, axis=0)                 # [KH*KW, N, Cin, OH, OW]
    patches = patches.transpose(1, 3, 4, 2, 0)        # [N, OH, OW, Cin, KH*KW]
    patches = patches.reshape(n * oh * ow, cin * KH * KW)
    return patches, oh, ow


def conv_block(x, weight, bias, gamma, beta):
    """x: [N, Cin, H, W] (NCHW). weight: [Cout, Cin, 4, 4]. Returns NCHW float32."""
    # The conv bias shifts every element of a channel by the same constant; train-mode
    # BatchNorm subtracts the batch mean of that channel, so the bias cancels exactly
    # in the forward activation.  It is therefore unused here (kept for API parity).
    del bias

    n, cin, h, w = x.shape
    cout = weight.shape[0]

    # im2col in bf16 (MXU input dtype); all BN statistics stay in f32.
    patches, oh, ow = _im2col(x.astype(jnp.bfloat16))
    m, k = patches.shape

    coutp = max(128, _round_up(cout, 128))            # lane-dense output channels
    vmem_limit = _vmem_limit_bytes()
    tm = _choose_tm(m, k, coutp, vmem_limit // 2)

    n_tiles = _cdiv(m, tm)
    nshards = 2 if n_tiles >= 2 else 1                # use both v7x TensorCores in pass 1
    tiles_per_shard = _cdiv(n_tiles, nshards)
    m_pad = nshards * tiles_per_shard * tm
    if m_pad != m:
        patches = jnp.pad(patches, ((0, m_pad - m), (0, 0)))

    # [Cout, Cin, KH, KW] -> [K, Coutp] (K ordered cin, kh, kw), channel-padded with zeros
    # (padded output channels compute to exactly 0 and are sliced off at the end).
    w2d = jnp.pad(weight.reshape(cout, cin * KH * KW).T.astype(jnp.bfloat16),
                  ((0, 0), (0, coutp - cout)))
    g2d = jnp.pad(gamma.astype(jnp.float32).reshape(1, cout), ((0, 0), (0, coutp - cout)),
                  constant_values=1.0)
    be2d = jnp.pad(beta.astype(jnp.float32).reshape(1, cout), ((0, 0), (0, coutp - cout)))

    # ---- Pass 1: streaming BN statistics (sharded over TensorCores) --------
    psum, psumsq = pl.pallas_call(
        _stats_kernel,
        out_shape=(
            jax.ShapeDtypeStruct((nshards, 1, coutp), jnp.float32),
            jax.ShapeDtypeStruct((nshards, 1, coutp), jnp.float32),
        ),
        grid_spec=pltpu.PrefetchScalarGridSpec(
            num_scalar_prefetch=0,
            grid=(nshards, tiles_per_shard),
            in_specs=[
                pl.BlockSpec((tm, k), lambda s, i: (s * tiles_per_shard + i, 0)),
                pl.BlockSpec((k, coutp), lambda s, i: (0, 0)),   # weights: resident
            ],
            out_specs=(
                pl.BlockSpec((1, 1, coutp), lambda s, i: (s, 0, 0)),  # per-shard sum
                pl.BlockSpec((1, 1, coutp), lambda s, i: (s, 0, 0)),  # per-shard sumsq
            ),
        ),
        compiler_params=pltpu.CompilerParams(
            dimension_semantics=("parallel", "arbitrary"),
            vmem_limit_bytes=vmem_limit,
        ),
    )(patches, w2d)

    # ---- BatchNorm scale/shift from the global batch statistics (tiny, f32) ----
    ysum = jnp.sum(psum, axis=0).reshape(1, coutp)
    ysumsq = jnp.sum(psumsq, axis=0).reshape(1, coutp)
    inv_m = 1.0 / float(m)                         # divide by TRUE M (padded rows add 0)
    mean = ysum * inv_m
    var = jnp.maximum(ysumsq * inv_m - mean * mean, 0.0)
    scale = g2d * lax.rsqrt(var + EPS)
    shift = be2d - mean * scale

    # ---- Pass 2: conv recompute + folded BN affine + LeakyReLU -------------
    out = pl.pallas_call(
        _conv_bn_act_kernel,
        out_shape=jax.ShapeDtypeStruct((m_pad, coutp), jnp.float32),
        grid_spec=pltpu.PrefetchScalarGridSpec(
            num_scalar_prefetch=0,
            grid=(m_pad // tm,),
            in_specs=[
                pl.BlockSpec((tm, k), lambda i: (i, 0)),
                pl.BlockSpec((k, coutp), lambda i: (0, 0)),     # weights: resident
                pl.BlockSpec((1, coutp), lambda i: (0, 0)),     # scale:   resident
                pl.BlockSpec((1, coutp), lambda i: (0, 0)),     # shift:   resident
            ],
            out_specs=pl.BlockSpec((tm, coutp), lambda i: (i, 0)),
        ),
        compiler_params=pltpu.CompilerParams(
            dimension_semantics=("parallel",),
            vmem_limit_bytes=vmem_limit,
        ),
    )(patches, w2d, scale, shift)

    # Strip padding and return NCHW (layout writeback kept in the wrapper).
    out = out[:m, :cout].reshape(n, oh, ow, cout).transpose(0, 3, 1, 2)
    return out


def _reference(x, weight, bias, gamma, beta):
    """Pure-JAX f32 reference of the ConvBlock forward pass (includes bias)."""
    y = lax.conv_general_dilated(
        x.astype(jnp.float32), weight.astype(jnp.float32),
        window_strides=(STRIDE, STRIDE), padding=((PAD, PAD), (PAD, PAD)),
        dimension_numbers=("NCHW", "OIHW", "NCHW"),
    ) + bias.reshape(1, -1, 1, 1)
    mean = jnp.mean(y, axis=(0, 2, 3), keepdims=True)
    var = jnp.mean((y - mean) ** 2, axis=(0, 2, 3), keepdims=True)
    yh = (y - mean) * lax.rsqrt(var + EPS)
    yh = yh * gamma.reshape(1, -1, 1, 1) + beta.reshape(1, -1, 1, 1)
    return jnp.where(yh >= 0.0, yh, NEG_SLOPE * yh)


if __name__ == "__main__":
    # Small shapes consistent with the module: N=2, Cin=4, H=W=16, Cout=8.
    N, CIN, H, W = 2, 4, 16, 16
    COUT = 8

    key = jax.random.PRNGKey(0)
    kx, kw_, kb, kg, kbe = jax.random.split(key, 5)

    x = jax.random.normal(kx, (N, CIN, H, W), dtype=jnp.float32)
    weight = 0.1 * jax.random.normal(kw_, (COUT, CIN, 4, 4), dtype=jnp.float32)
    bias = 0.1 * jax.random.normal(kb, (COUT,), dtype=jnp.float32)
    gamma = 1.0 + 0.1 * jax.random.normal(kg, (COUT,), dtype=jnp.float32)
    beta = 0.1 * jax.random.normal(kbe, (COUT,), dtype=jnp.float32)

    out = conv_block(x, weight, bias, gamma, beta)
    out = jax.block_until_ready(out)

    assert out.shape == (N, COUT, H // 2, W // 2), out.shape

    # Tight check against a reference with identical bf16 rounding of the matmul inputs
    # (isolates kernel-structure correctness — including the bias-cancellation argument —
    # from the intentional bf16 cast).  The reference explicitly includes the bias.
    ref_bf16in = _reference(
        x.astype(jnp.bfloat16).astype(jnp.float32),
        weight.astype(jnp.bfloat16).astype(jnp.float32),
        bias, gamma, beta)
    err_tight = float(jnp.max(jnp.abs(out - ref_bf16in)))
    assert jnp.allclose(out, ref_bf16in, atol=2e-3, rtol=2e-3), err_tight

    # Looser sanity check against the full-f32 reference (bf16 MXU inputs).
    ref_f32 = _reference(x, weight, bias, gamma, beta)
    err_loose = float(jnp.max(jnp.abs(out - ref_f32)))
    assert jnp.allclose(out, ref_f32, atol=3e-2, rtol=3e-2), err_loose

    print("KERNEL_OK")
</pallas_src>

<mosaic_0001>
module attributes {stable_mosaic.version = 11 : i64} {
  func.func @_stats_kernel(%arg0: i32, %arg1: i32, %arg2: memref<128x64xbf16, #tpu.memory_space<vmem>>, %arg3: memref<64x128xbf16, #tpu.memory_space<vmem>>, %arg4: memref<1x1x128xf32, #tpu.memory_space<vmem>>, %arg5: memref<1x1x128xf32, #tpu.memory_space<vmem>>) attributes {dimension_semantics = [#tpu.dimension_semantics<parallel>, #tpu.dimension_semantics<arbitrary>], iteration_bounds = array<i64: 1, 1>, scalar_prefetch = 0 : i64, scratch_operands = 0 : i64, tpu.core_type = #tpu.core_type<tc>, window_params = [{transform_indices = @transform_0, window_bounds = array<i64: 128, 64>}, {pipeline_mode = #tpu.pipeline_mode<synchronous>, transform_indices = @transform_1, window_bounds = array<i64: 64, 128>}, {transform_indices = @transform_2, window_bounds = array<i64: 1, 1, 128>}, {transform_indices = @transform_3, window_bounds = array<i64: 1, 1, 128>}]} {
    %c0_i32 = arith.constant 0 : i32
    %0 = arith.cmpi eq, %arg1, %c0_i32 : i32
    %1 = arith.extui %0 : i1 to i32
    %c0_i32_0 = arith.constant 0 : i32
    %2 = arith.cmpi ne, %1, %c0_i32_0 : i32
    scf.if %2 {
      %cst_18 = arith.constant 0.000000e+00 : f32
      %19 = vector.broadcast %cst_18 : f32 to vector<1x1x128xf32>
      %c0_19 = arith.constant 0 : index
      %c0_20 = arith.constant 0 : index
      %c0_21 = arith.constant 0 : index
      %20 = vector.load %arg4[%c0_19, %c0_20, %c0_21] : memref<1x1x128xf32, #tpu.memory_space<vmem>>, vector<1x1x128xf32>
      tpu.vector_store %arg4[%c0_19, %c0_20, %c0_21], %19 {strides = array<i32>} : memref<1x1x128xf32, #tpu.memory_space<vmem>>, vector<1x1x128xf32>,
      %cst_22 = arith.constant 0.000000e+00 : f32
      %21 = vector.broadcast %cst_22 : f32 to vector<1x1x128xf32>
      %c0_23 = arith.constant 0 : index
      %c0_24 = arith.constant 0 : index
      %c0_25 = arith.constant 0 : index
      %22 = vector.load %arg5[%c0_23, %c0_24, %c0_25] : memref<1x1x128xf32, #tpu.memory_space<vmem>>, vector<1x1x128xf32>
      tpu.vector_store %arg5[%c0_23, %c0_24, %c0_25], %21 {strides = array<i32>} : memref<1x1x128xf32, #tpu.memory_space<vmem>>, vector<1x1x128xf32>,
    } else {
    }
    %c0 = arith.constant 0 : index
    %c0_1 = arith.constant 0 : index
    %3 = vector.load %arg2[%c0, %c0_1] : memref<128x64xbf16, #tpu.memory_space<vmem>>, vector<128x64xbf16>
    %c0_2 = arith.constant 0 : index
    %c0_3 = arith.constant 0 : index
    %4 = vector.load %arg3[%c0_2, %c0_3] : memref<64x128xbf16, #tpu.memory_space<vmem>>, vector<64x128xbf16>
    %cst = arith.constant dense<0.000000e+00> : vector<128x128xf32>
    %5 = tpu.matmul %3, %4, %cst {dimension_numbers = #tpu.dot_dimension_numbers<[1], [0], [0], [1], [0, 0, 1, 1], [], []>} : vector<128x64xbf16>, vector<64x128xbf16>, vector<128x128xf32> -> vector<128x128xf32>
    %c0_4 = arith.constant 0 : index
    %c0_5 = arith.constant 0 : index
    %c0_6 = arith.constant 0 : index
    %6 = vector.load %arg4[%c0_4, %c0_5, %c0_6] : memref<1x1x128xf32, #tpu.memory_space<vmem>>, vector<1x1x128xf32>
    %cst_7 = arith.constant dense<0.000000e+00> : vector<128xf32>
    %7 = vector.multi_reduction <add>, %5, %cst_7 [0] : vector<128x128xf32> to vector<128xf32>
    %8 = vector.shape_cast %7 : vector<128xf32> to vector<1x128xf32>
    %9 = vector.shape_cast %8 : vector<1x128xf32> to vector<1x1x128xf32>
    %10 = arith.addf %6, %9 : vector<1x1x128xf32>
    %c0_8 = arith.constant 0 : index
    %c0_9 = arith.constant 0 : index
    %c0_10 = arith.constant 0 : index
    %11 = vector.load %arg4[%c0_8, %c0_9, %c0_10] : memref<1x1x128xf32, #tpu.memory_space<vmem>>, vector<1x1x128xf32>
    tpu.vector_store %arg4[%c0_8, %c0_9, %c0_10], %10 {strides = array<i32>} : memref<1x1x128xf32, #tpu.memory_space<vmem>>, vector<1x1x128xf32>,
    %c0_11 = arith.constant 0 : index
    %c0_12 = arith.constant 0 : index
    %c0_13 = arith.constant 0 : index
    %12 = vector.load %arg5[%c0_11, %c0_12, %c0_13] : memref<1x1x128xf32, #tpu.memory_space<vmem>>, vector<1x1x128xf32>
    %13 = arith.mulf %5, %5 : vector<128x128xf32>
    %cst_14 = arith.constant dense<0.000000e+00> : vector<128xf32>
    %14 = vector.multi_reduction <add>, %13, %cst_14 [0] : vector<128x128xf32> to vector<128xf32>
    %15 = vector.shape_cast %14 : vector<128xf32> to vector<1x128xf32>
    %16 = vector.shape_cast %15 : vector<1x128xf32> to vector<1x1x128xf32>
    %17 = arith.addf %12, %16 : vector<1x1x128xf32>
    %c0_15 = arith.constant 0 : index
    %c0_16 = arith.constant 0 : index
    %c0_17 = arith.constant 0 : index
    %18 = vector.load %arg5[%c0_15, %c0_16, %c0_17] : memref<1x1x128xf32, #tpu.memory_space<vmem>>, vector<1x1x128xf32>
    tpu.vector_store %arg5[%c0_15, %c0_16, %c0_17], %17 {strides = array<i32>} : memref<1x1x128xf32, #tpu.memory_space<vmem>>, vector<1x1x128xf32>,
    return
  }
  func.func @transform_0(%arg0: i32, %arg1: i32) -> (i32, i32) {
    %c1_i32 = arith.constant 1 : i32
    %0 = arith.muli %arg0, %c1_i32 : i32
    %1 = arith.addi %0, %arg1 : i32
    %c0_i32 = arith.constant 0 : i32
    %c0_i32_0 = arith.constant 0 : i32
    return %1, %c0_i32 : i32, i32
  }
  func.func @transform_1(%arg0: i32, %arg1: i32) -> (i32, i32) {
    %c0_i32 = arith.constant 0 : i32
    %c0_i32_0 = arith.constant 0 : i32
    %c0_i32_1 = arith.constant 0 : i32
    return %c0_i32, %c0_i32_0 : i32, i32
  }
  func.func @transform_2(%arg0: i32, %arg1: i32) -> (i32, i32, i32) {
    %c0_i32 = arith.constant 0 : i32
    %c0_i32_0 = arith.constant 0 : i32
    %c0_i32_1 = arith.constant 0 : i32
    return %arg0, %c0_i32, %c0_i32_0 : i32, i32, i32
  }
  func.func @transform_3(%arg0: i32, %arg1: i32) -> (i32, i32, i32) {
    %c0_i32 = arith.constant 0 : i32
    %c0_i32_0 = arith.constant 0 : i32
    %c0_i32_1 = arith.constant 0 : i32
    return %arg0, %c0_i32, %c0_i32_0 : i32, i32, i32
  }
}

</mosaic_0001>

<llo_original>
// kernel: tpu_custom_call.1
$region0: #{tpu_custom_call.1}
  #allocation0 [shape = 'u32[]', space=smem, size = 0x4, offset = 0x4, fixed_abs, tag = 'smem constant byte address 0x4 - core index']
  #allocation1 [shape = 'u32[144,128]{1,0:T(1,128)}', space=vmem, size = 0x12000, scoped, tag = 'internal scratch']
  %s0 = inlined_call_operand.vmem [shape: bf16[128,64], index: 0, kind: input, shape index: {}]
  %s1 = inlined_call_operand.vmem [shape: bf16[64,128], index: 1, kind: input, shape index: {}]
  %s2 = inlined_call_operand.hbm [shape: f32[1,1,128], index: 2, kind: output, shape index: {0}]
  %s3 = inlined_call_operand.hbm [shape: f32[1,1,128], index: 3, kind: output, shape index: {1}]
  %4 = xla_tuple %s2, %s3
  %s5 = sld [smem:[#allocation0]]
  $region30: #{tpu_custom_call.1} parent=0
    _
  %s7 = ssub.s32 1, %s5
  %s8 = scalar_select 0, %s7, %s5
  $region1: #{tpu_custom_call.1} parent=0
    #allocation2 [shape = 'u8[512]{0}', space=vmem, size = 0x400, scoped, tag = 'output window, operand 0, single buffered']
    #allocation3 [shape = 's32[1]{0}', space=sflag, size = 0x4, scoped, tag = 'scoped memory for tpu_custom_call.1']
    #allocation4 [shape = 'u8[512]{0}', space=vmem, size = 0x400, scoped, tag = 'output window, operand 1, single buffered']
    #allocation5 [shape = 's32[1]{0}', space=sflag, size = 0x4, scoped, tag = 'scoped memory for tpu_custom_call.1']
    %9 = vsyncpa [#allocation3], 0
    %10 = vsyncpa [#allocation5], 0
    // Predicated region
    $region2: #{tpu_custom_call.1} parent=1 // pred_check
      _
    $region3: #{tpu_custom_call.1} parent=1 // pred_check_branch
      %12 = sbr.rel (0) target = $region5
    $region4: #{tpu_custom_call.1} parent=1 // pred_region
      %s13 = sadd.s32 0, 0
      %s14 = smul.u32 16, %s13
      %p15 = scmp.lt.s32.totalorder %s14, 15
      %s16 = scalar_select %p15, %s14, 15
      %s17 = smul.addr %s16, 4
      %s18 = scalar_lea.vmem %s0, %s17
      %s19 = sadd.s32 0, 0
      %s20 = smul.u32 16, %s19
    $region5: #{tpu_custom_call.1} parent=1 // pred_fallthru
      _
    // Predicated region
    $region6: #{tpu_custom_call.1} parent=1 // pred_check
      _
    $region7: #{tpu_custom_call.1} parent=1 // pred_check_branch
      %22 = sbr.rel (0) target = $region9
    $region8: #{tpu_custom_call.1} parent=1 // pred_region
      _
    $region9: #{tpu_custom_call.1} parent=1 // pred_fallthru
      _
    %s23 = sadd.s32 0, 0
    %s24 = smul.u32 16, %s23
    %p25 = scmp.lt.s32.totalorder %s24, 15
    %s26 = scalar_select %p25, %s24, 15
    %s27 = smul.addr %s26, 4
    %s28 = scalar_lea.vmem %s0, %s27
    %s29 = sadd.s32 0, 0
    %s30 = smul.u32 16, %s29
    %p31 = scmp.lt.s32.totalorder %s30, 15
    %s32 = scalar_select %p31, %s30, 15
    %s33 = smul.addr %s32, 4
    %s34 = scalar_lea.vmem %s0, %s33
    %s35 = sadd.s32 0, 0
    %s36 = smul.u32 16, %s35
    %p38 = scmp.eq.s32.totalorder 0, 0
    // Predicated region
    $region10: #{tpu_custom_call.1} parent=1 // pred_check
      %p39 = pneg %p38
    $region11: #{tpu_custom_call.1} parent=1 // pred_check_branch
      %41 = sbr.rel (%p39) target = $region13
    $region12: #{tpu_custom_call.1} parent=1 // pred_region
      %42 = vst [vmem:[#allocation2] sm:$0x1] 0.0
      %43 = vst [vmem:[#allocation4] sm:$0x1] 0.0
    $region13: #{tpu_custom_call.1} parent=1 // pred_fallthru
      _
    %v44 = vld [vmem:[%s34] sm:$0xf]
    %v45 = vld [vmem:[%s34 + $0x4] sm:$0xf]
    %v46 = vld [vmem:[%s34 + $0x8] sm:$0xf]
    %v47 = vld [vmem:[%s34 + $0xc] sm:$0xf]
    %v48 = vld [vmem:[%s34 + $0x10] sm:$0xf]
    %v49 = vld [vmem:[%s34 + $0x14] sm:$0xf]
    %v50 = vld [vmem:[%s34 + $0x18] sm:$0xf]
    %v51 = vld [vmem:[%s34 + $0x1c] sm:$0xf]
    %v52 = vld [vmem:[%s34 + $0x20] sm:$0xf]
    %v53 = vld [vmem:[%s34 + $0x24] sm:$0xf]
    %v54 = vld [vmem:[%s34 + $0x28] sm:$0xf]
    %v55 = vld [vmem:[%s34 + $0x2c] sm:$0xf]
    %v56 = vld [vmem:[%s34 + $0x30] sm:$0xf]
    %v57 = vld [vmem:[%s34 + $0x34] sm:$0xf]
    %v58 = vld [vmem:[%s34 + $0x38] sm:$0xf]
    %v59 = vld [vmem:[%s34 + $0x3c] sm:$0xf]
    %v60 = vld [vmem:[%s1] sm:$0xf]
    %v61 = vld [vmem:[%s1 + $0x4] sm:$0xf]
    %v62 = vld [vmem:[%s1 + $0x8] sm:$0xf]
    %v63 = vld [vmem:[%s1 + $0xc] sm:$0xf]
    %v64 = vld [vmem:[%s1 + $0x10] sm:$0xf]
    %v65 = vld [vmem:[%s1 + $0x14] sm:$0xf]
    %v66 = vld [vmem:[%s1 + $0x18] sm:$0xf]
    %v67 = vld [vmem:[%s1 + $0x1c] sm:$0xf]
    %v84 = vunpack.c.l.b16 %v44
    %v85 = vunpack.c.l.b16 %v45
    %v86 = vunpack.c.l.b16 %v46
    %v87 = vunpack.c.l.b16 %v47
    %v88 = vunpack.c.l.b16 %v48
    %v89 = vunpack.c.l.b16 %v49
    %v90 = vunpack.c.l.b16 %v50
    %v91 = vunpack.c.l.b16 %v51
    %v92 = vunpack.c.l.b16 %v52
    %v93 = vunpack.c.l.b16 %v53
    %v94 = vunpack.c.l.b16 %v54
    %v95 = vunpack.c.l.b16 %v55
    %v96 = vunpack.c.l.b16 %v56
    %v97 = vunpack.c.l.b16 %v57
    %v98 = vunpack.c.l.b16 %v58
    %v99 = vunpack.c.l.b16 %v59
    %v100 = vpack.c.b16 %v85, %v84
    %v101 = vpack.c.b16 %v87, %v86
    %v102 = vpack.c.b16 %v89, %v88
    %v103 = vpack.c.b16 %v91, %v90
    %v104 = vpack.c.b16 %v93, %v92
    %v105 = vpack.c.b16 %v95, %v94
    %v106 = vpack.c.b16 %v97, %v96
    %v107 = vpack.c.b16 %v99, %v98
    %v116 = vunpack.c.l.b16 %v60
    %v117 = vunpack.c.l.b16 %v61
    %v118 = vunpack.c.l.b16 %v62
    %v119 = vunpack.c.l.b16 %v63
    %v120 = vunpack.c.l.b16 %v64
    %v121 = vunpack.c.l.b16 %v65
    %v122 = vunpack.c.l.b16 %v66
    %v123 = vunpack.c.l.b16 %v67
    %v124 = vpack.c.b16 %v117, %v116
    %v125 = vpack.c.b16 %v119, %v118
    %v126 = vpack.c.b16 %v121, %v120
    %v127 = vpack.c.b16 %v123, %v122
    %vm132 = vcmask 523264
    %v134 = vsel %vm132, %v100, 0
    %v137 = vsel %vm132, %v101, 0
    %v140 = vsel %vm132, %v102, 0
    %v143 = vsel %vm132, %v103, 0
    %v146 = vsel %vm132, %v104, 0
    %v149 = vsel %vm132, %v105, 0
    %v152 = vsel %vm132, %v106, 0
    %v155 = vsel %vm132, %v107, 0
    %157 = vmatprep.subr.bf16.mxu0 0
    %158 = vmatpush1.bf16.msra.mxu0 %v124
    %159 = vmatprep.subr.bf16.mxu0 0
    %160 = vmatpush1.bf16.msra.mxu0 %v125
    %161 = vmatprep.subr.bf16.mxu0 0
    %162 = vmatpush1.bf16.msra.mxu0 %v126
    %163 = vmatprep.subr.bf16.mxu0 0
    %164 = vmatpush1.bf16.msra.mxu0 %v127
    %165 = vmatprep.subr.bf16.mxu0 0
    %166 = vmatpush1.bf16.msra.mxu0 0
    %167 = vmatprep.subr.bf16.mxu0 0
    %168 = vmatpush1.bf16.msra.mxu0 0
    %169 = vmatprep.subr.bf16.mxu0 0
    %170 = vmatpush1.bf16.msra.mxu0 0
    %171 = vmatprep.subr.bf16.mxu0 0
    %172 = vmatpush1.bf16.msra.mxu0 0
    %173 = vmatprep.subr.bf16.mxu0 0
    %174 = vmatpush1.bf16.msra.mxu0 0
    %175 = vmatprep.subr.bf16.mxu0 0
    %176 = vmatpush1.bf16.msra.mxu0 0
    %177 = vmatprep.subr.bf16.mxu0 0
    %178 = vmatpush1.bf16.msra.mxu0 0
    %179 = vmatprep.subr.bf16.mxu0 0
    %180 = vmatpush1.bf16.msra.mxu0 0
    %181 = vmatprep.subr.bf16.mxu0 0
    %182 = vmatpush1.bf16.msra.mxu0 0
    %183 = vmatprep.subr.bf16.mxu0 0
    %184 = vmatpush1.bf16.msra.mxu0 0
    %185 = vmatprep.subr.bf16.mxu0 0
    %186 = vmatpush1.bf16.msra.mxu0 0
    %187 = vmatprep.subr.bf16.mxu0 0
    %188 = vmatpush1.bf16.msra.mxu0 0
    %189 = vmatprep.mubr.bf16.mxu0 0
    %190 = vmatmul.mubr.bf16.gmra.mrb[0].mxu0 %v134
    %v191 = vpop.f32.mrb[0].mxu0
    %v192 = vadd.f32 0.0, %v191
    %v193 = vpop.f32.mrb[0].mxu0
    %v194 = vpop.f32.mrb[0].mxu0
    %v195 = vadd.f32 0.0, %v194
    %v196 = vpop.f32.mrb[0].mxu0
    %197 = vmatprep.mubr.bf16.mxu0 0
    %198 = vmatmul.mubr.bf16.gmra.mrb[0].mxu0 %v137
    %v199 = vpop.f32.mrb[0].mxu0
    %v200 = vadd.f32 0.0, %v199
    %v201 = vpop.f32.mrb[0].mxu0
    %v202 = vpop.f32.mrb[0].mxu0
    %v203 = vadd.f32 0.0, %v202
    %v204 = vpop.f32.mrb[0].mxu0
    %205 = vmatprep.mubr.bf16.mxu0 0
    %206 = vmatmul.mubr.bf16.gmra.mrb[0].mxu0 %v140
    %v207 = vpop.f32.mrb[0].mxu0
    %v208 = vadd.f32 0.0, %v207
    %v209 = vpop.f32.mrb[0].mxu0
    %v210 = vpop.f32.mrb[0].mxu0
    %v211 = vadd.f32 0.0, %v210
    %v212 = vpop.f32.mrb[0].mxu0
    %213 = vmatprep.mubr.bf16.mxu0 0
    %214 = vmatmul.mubr.bf16.gmra.mrb[0].mxu0 %v143
    %v215 = vpop.f32.mrb[0].mxu0
    %v216 = vadd.f32 0.0, %v215
    %v217 = vpop.f32.mrb[0].mxu0
    %v218 = vpop.f32.mrb[0].mxu0
    %v219 = vadd.f32 0.0, %v218
    %v220 = vpop.f32.mrb[0].mxu0
    %221 = vmatprep.mubr.bf16.mxu0 0
    %222 = vmatmul.mubr.bf16.gmra.mrb[0].mxu0 %v146
    %v223 = vpop.f32.mrb[0].mxu0
    %v224 = vadd.f32 0.0, %v223
    %v225 = vpop.f32.mrb[0].mxu0
    %v226 = vpop.f32.mrb[0].mxu0
    %v227 = vadd.f32 0.0, %v226
    %v228 = vpop.f32.mrb[0].mxu0
    %229 = vmatprep.mubr.bf16.mxu0 0
    %230 = vmatmul.mubr.bf16.gmra.mrb[0].mxu0 %v149
    %v231 = vpop.f32.mrb[0].mxu0
    %v232 = vadd.f32 0.0, %v231
    %v233 = vpop.f32.mrb[0].mxu0
    %v234 = vpop.f32.mrb[0].mxu0
    %v235 = vadd.f32 0.0, %v234
    %v236 = vpop.f32.mrb[0].mxu0
    %237 = vmatprep.mubr.bf16.mxu0 0
    %238 = vmatmul.mubr.bf16.gmra.mrb[0].mxu0 %v152
    %v239 = vpop.f32.mrb[0].mxu0
    %v240 = vadd.f32 0.0, %v239
    %v241 = vpop.f32.mrb[0].mxu0
    %v242 = vpop.f32.mrb[0].mxu0
    %v243 = vadd.f32 0.0, %v242
    %v244 = vpop.f32.mrb[0].mxu0
    %245 = vmatprep.mubr.bf16.mxu0 0
    %246 = vmatmul.mubr.bf16.gmra.mrb[0].mxu0 %v155
    %v247 = vpop.f32.mrb[0].mxu0
    %v248 = vadd.f32 0.0, %v247
    %v249 = vpop.f32.mrb[0].mxu0
    %v250 = vpop.f32.mrb[0].mxu0
    %v251 = vadd.f32 0.0, %v250
    %v252 = vpop.f32.mrb[0].mxu0
    %253 = vdwg.mxu0
    %v254 = vld [vmem:[#allocation2] sm:$0x1]
    %v255 = vadd.f32 %v192, %v195
    %v256 = vadd.f32 %v255, %v200
    %v257 = vadd.f32 %v256, %v203
    %v258 = vadd.f32 %v257, %v208
    %v259 = vadd.f32 %v258, %v211
    %v260 = vadd.f32 %v259, %v216
    %v261 = vadd.f32 %v260, %v219
    %v262 = vadd.f32 %v261, %v224
    %v263 = vadd.f32 %v262, %v227
    %v264 = vadd.f32 %v263, %v232
    %v265 = vadd.f32 %v264, %v235
    %v266 = vadd.f32 %v265, %v240
    %v267 = vadd.f32 %v266, %v243
    %v268 = vadd.f32 %v267, %v248
    %v269 = vadd.f32 %v268, %v251
    %v270 = vrot.slane %v269, 4
    %v271 = vadd.f32 %v269, %v270
    %v272 = vrot.slane %v271, 2
    %v273 = vadd.f32 %v271, %v272
    %v274 = vrot.slane %v273, 1
    %v275 = vadd.f32 %v273, %v274
    %v276 = vadd.f32 %v254, %v275
    %277 = vst [vmem:[#allocation2] sm:$0x1] %v276
    %v278 = vld [vmem:[#allocation4] sm:$0x1]
    %v279 = vmul.f32 %v192, %v192
    %v280 = vmul.f32 %v195, %v195
    %v281 = vmul.f32 %v200, %v200
    %v282 = vmul.f32 %v203, %v203
    %v283 = vmul.f32 %v208, %v208
    %v284 = vmul.f32 %v211, %v211
    %v285 = vmul.f32 %v216, %v216
    %v286 = vmul.f32 %v219, %v219
    %v287 = vmul.f32 %v224, %v224
    %v288 = vmul.f32 %v227, %v227
    %v289 = vmul.f32 %v232, %v232
    %v290 = vmul.f32 %v235, %v235
    %v291 = vmul.f32 %v240, %v240
    %v292 = vmul.f32 %v243, %v243
    %v293 = vmul.f32 %v248, %v248
    %v294 = vmul.f32 %v251, %v251
    %v295 = vadd.f32 %v279, %v280
    %v296 = vadd.f32 %v295, %v281
    %v297 = vadd.f32 %v296, %v282
    %v298 = vadd.f32 %v297, %v283
    %v299 = vadd.f32 %v298, %v284
    %v300 = vadd.f32 %v299, %v285
    %v301 = vadd.f32 %v300, %v286
    %v302 = vadd.f32 %v301, %v287
    %v303 = vadd.f32 %v302, %v288
    %v304 = vadd.f32 %v303, %v289
    %v305 = vadd.f32 %v304, %v290
    %v306 = vadd.f32 %v305, %v291
    %v307 = vadd.f32 %v306, %v292
    %v308 = vadd.f32 %v307, %v293
    %v309 = vadd.f32 %v308, %v294
    %v310 = vrot.slane %v309, 4
    %v311 = vadd.f32 %v309, %v310
    %v312 = vrot.slane %v311, 2
    %v313 = vadd.f32 %v311, %v312
    %v314 = vrot.slane %v313, 1
    %v315 = vadd.f32 %v313, %v314
    %v316 = vadd.f32 %v278, %v315
    %317 = vst [vmem:[#allocation4] sm:$0x1] %v316
    // Predicated region
    $region14: #{tpu_custom_call.1} parent=1 // pred_check
      _
    $region15: #{tpu_custom_call.1} parent=1 // pred_check_branch
      %319 = sbr.rel (0) target = $region17
    $region16: #{tpu_custom_call.1} parent=1 // pred_region
      %s321 = ssub.s32 16, 16
      %322 = vsyncadd [#allocation3], %s321
      %s324 = sshll.u32 [#allocation2], 4
      %s325 = int_to_ptr.vmem [resolvable:$true] %s324
      %327 = dma.vmem_to_hbm [thread:$0]  %s325, 16, %s2, [#allocation3]
    $region17: #{tpu_custom_call.1} parent=1 // pred_fallthru
      _
    // Predicated region
    $region18: #{tpu_custom_call.1} parent=1 // pred_check
      _
    $region19: #{tpu_custom_call.1} parent=1 // pred_check_branch
      %329 = sbr.rel (0) target = $region21
    $region20: #{tpu_custom_call.1} parent=1 // pred_region
      %s331 = ssub.s32 16, 16
      %332 = vsyncadd [#allocation5], %s331
      %s334 = sshll.u32 [#allocation4], 4
      %s335 = int_to_ptr.vmem [resolvable:$true] %s334
      %337 = dma.vmem_to_hbm [thread:$0]  %s335, 16, %s3, [#allocation5]
    $region21: #{tpu_custom_call.1} parent=1 // pred_fallthru
      _
    // Predicated region
    $region22: #{tpu_custom_call.1} parent=1 // pred_check
      _
    $region23: #{tpu_custom_call.1} parent=1 // pred_check_branch
      %339 = sbr.rel (0) target = $region25
    $region24: #{tpu_custom_call.1} parent=1 // pred_region
      %340 = dma.done [#allocation3], 16
    $region25: #{tpu_custom_call.1} parent=1 // pred_fallthru
      _
    // Predicated region
    $region26: #{tpu_custom_call.1} parent=1 // pred_check
      _
    $region27: #{tpu_custom_call.1} parent=1 // pred_check_branch
      %342 = sbr.rel (0) target = $region29
    $region28: #{tpu_custom_call.1} parent=1 // pred_region
      %343 = dma.done [#allocation5], 16
    $region29: #{tpu_custom_call.1} parent=1 // pred_fallthru
      _
    %344 = vsyncpa [#allocation3], 1
    %345 = vsyncpa [#allocation5], 1

</llo_original>
